<compile_context>
chip_gen: v6e
topology: v6e:2x2x1
jax: 0.10.0
libtpu: 0.0.40
codegen_flags: <defaults>
</compile_context>

<pallas_src>
import jax
import jax.numpy as jnp
from jax import lax
from jax.experimental import pallas as pl
from jax.experimental.pallas import tpu as pltpu


def _fa_kernel(idx_ref, x_ref, adj_ref, o_ref, m_acc, cnt_acc):
    """Grid = (batch, K-tile).  One step = one (batch, K-tile) pair.

    idx_ref : (1, 1, Kt, N) int32   indices[b, kt_block]
    x_ref   : (1, N, D)     f32     features x[b]          (resident across kt)
    adj_ref : (1, Kt, N, N) f32     adjacency slab adj[b, kt_block]
    o_ref   : (1, N, D)     f32     output (written at last kt step only)
    m_acc   : (N, N)        f32     effective-operator accumulator
    cnt_acc : (N, 1)        f32     per-node occurrence counts
    """
    kt_step = pl.program_id(1)

    @pl.when(kt_step == 0)
    def _init():
        m_acc[...] = jnp.zeros_like(m_acc)
        cnt_acc[...] = jnp.zeros_like(cnt_acc)

    idx = idx_ref[0, 0]                                       # (Kt, N) int32
    adj = adj_ref[0].astype(jnp.bfloat16)                     # (Kt, N, N) bf16
    Kt, N, _ = adj.shape

    # One-hot Q[k, j, m] = [idx[k, j] == m], exact 0/1 in bf16.
    m_iota = lax.broadcasted_iota(jnp.int32, (1, 1, N), 2)
    q = (m_iota == idx[:, :, None]).astype(jnp.bfloat16)      # (Kt, N, N) bf16

    # Gather matmul (batched over k, bf16 x bf16 -> f32 acc):
    #   A[k, i, m] = sum_j adj[k, i, j] * Q[k, j, m]
    a = lax.dot_general(adj, q, (((2,), (1,)), ((0,), (0,))),
                        preferred_element_type=jnp.float32)   # (Kt, N, N) f32

    qflat = q.reshape(Kt * N, N)                               # (Kt*N, N) bf16
    aflat = a.astype(jnp.bfloat16).reshape(Kt * N, N)          # (Kt*N, N) bf16

    # Scatter contraction, flattened over the fused (k, i) axis:
    #   M[n, m] += sum_p Qflat[p, n] * Aflat[p, m]
    m_acc[...] += lax.dot_general(qflat, aflat, (((0,), (0,)), ((), ())),
                                  preferred_element_type=jnp.float32)

    # Per-node counts: cnt[n] += sum_p Qflat[p, n]  (tiny MXU dot, stays (N,1)).
    ones = jnp.ones((Kt * N, 1), jnp.bfloat16)
    cnt_acc[...] += lax.dot_general(qflat, ones, (((0,), (0,)), ((), ())),
                                    preferred_element_type=jnp.float32)

    @pl.when(kt_step == pl.num_programs(1) - 1)
    def _finalize():
        inv = pl.reciprocal(cnt_acc[...] + 1e-14, approx=True)    # (N, 1)
        m_bf = (m_acc[...] * inv).astype(jnp.bfloat16)             # row-scaled M
        x_bf = x_ref[0].astype(jnp.bfloat16)                       # (N, D)
        out = lax.dot_general(m_bf, x_bf, (((1,), (0,)), ((), ())),
                              preferred_element_type=jnp.float32)  # (N, D) f32
        o_ref[0] = out.astype(o_ref.dtype)


def _pick_k_tile(K, N, budget_bytes=12 * 1024 * 1024):
    """Largest divisor of K whose per-step adj block + intermediates fit budget."""
    per_k = 24 * N * N + 1  # adj f32 x2 buffers + q/a bf16/f32 intermediates (rough)
    max_kt = max(1, budget_bytes // per_k)
    for kt in range(min(K, int(max_kt)), 0, -1):
        if K % kt == 0:
            return kt
    return 1


def feature_aggregation_pallas(x, adj, batch_indices, indices):
    """x: (B,N,D) f32, adj: (B,K,N,N) f32, indices: (B,K,N) int -> (B,N,D).

    batch_indices is accepted for API parity with the PyTorch module.
    # TODO(synk): arbitrary (non-arange) batch_indices would need a cross-batch
    # gather; the per-batch grid axis supplies arange(B) implicitly.
    """
    B, N, D = x.shape
    K = indices.shape[1]
    del batch_indices

    Kt = _pick_k_tile(K, N)
    Kc = K // Kt

    # Reshape indices so the K-tile lands on a "full-dim" block axis.
    idx = indices.astype(jnp.int32).reshape(B, Kc, Kt, N)

    grid_spec = pltpu.PrefetchScalarGridSpec(
        num_scalar_prefetch=0,
        grid=(B, Kc),
        in_specs=[
            pl.BlockSpec((1, 1, Kt, N), lambda b, k: (b, k, 0, 0)),   # indices
            pl.BlockSpec((1, N, D), lambda b, k: (b, 0, 0)),          # x[b] (resident)
            pl.BlockSpec((1, Kt, N, N), lambda b, k: (b, k, 0, 0)),   # adj slab
        ],
        out_specs=pl.BlockSpec((1, N, D), lambda b, k: (b, 0, 0)),
        scratch_shapes=[
            pltpu.VMEM((N, N), jnp.float32),   # M accumulator
            pltpu.VMEM((N, 1), jnp.float32),   # count accumulator
        ],
    )

    # VMEM budget from the actual per-step footprint (adj f32 double-buffered,
    # bf16/f32 intermediates, x/out blocks, scratch), clamped under v7x's 64 MiB.
    vmem_est = (2 * 4 * Kt * N * N        # adj f32 blocks (double-buffered)
                + 10 * Kt * N * N         # q bf16 + a f32 + bf16 copies
                + 4 * 4 * N * D           # x / out blocks
                + 4 * N * N + 4096)       # scratch
    vmem_limit = int(min(max(2 * vmem_est, 32 * 1024 * 1024), 56 * 1024 * 1024))

    flops = B * (4 * K * N * N * N + 2 * N * N * D + 2 * K * N * N)
    bytes_accessed = 4 * (B * K * N * N + 2 * B * N * D + B * K * N)
    cost = pl.CostEstimate(flops=flops, transcendentals=B * N,
                           bytes_accessed=bytes_accessed)

    out = pl.pallas_call(
        _fa_kernel,
        out_shape=jax.ShapeDtypeStruct((B, N, D), jnp.float32),
        grid_spec=grid_spec,
        compiler_params=pltpu.CompilerParams(
            dimension_semantics=("parallel", "arbitrary"),
            vmem_limit_bytes=vmem_limit),
        cost_estimate=cost,
    )(idx, x, adj)

    return out.astype(x.dtype)


def feature_aggregation_ref(x, adj, batch_indices, indices):
    """Pure-JAX (f32) reference mirroring the PyTorch forward."""
    B, N, D = x.shape
    K = indices.shape[1]
    sel = x[batch_indices, indices]                       # (B, K, N, D)
    node_new = jnp.matmul(adj, sel).reshape(B, K * N, D)  # (B, K*N, D)
    idx_flat = indices.reshape(B, K * N)
    barange = jnp.arange(B)[:, None]
    dict1 = jnp.zeros((B, N, D), x.dtype).at[barange, idx_flat].add(node_new)
    cnt = jnp.full((B, N), 1e-14, x.dtype).at[barange, idx_flat].add(1.0)
    return dict1 / cnt[..., None]


if __name__ == "__main__":
    B, K, N, D = 2, 3, 16, 32

    key = jax.random.PRNGKey(0)
    kx, kadj, kidx = jax.random.split(key, 3)

    x = jax.random.normal(kx, (B, N, D), dtype=jnp.float32)
    adj = jax.random.normal(kadj, (B, K, N, N), dtype=jnp.float32)
    indices = jax.random.randint(kidx, (B, K, N), 0, N, dtype=jnp.int32)
    batch_indices = jnp.arange(B, dtype=jnp.int32)[:, None, None]  # (B,1,1)

    out = feature_aggregation_pallas(x, adj, batch_indices, indices)
    out = jax.block_until_ready(out)

    ref = feature_aggregation_ref(x, adj, batch_indices, indices)
    assert out.shape == (B, N, D)

    # All matmul operands are streamed to the MXU in bf16 (per perf review);
    # compare with a scale-normalized max error consistent with bf16 rounding.
    err = float(jnp.max(jnp.abs(out - ref)) /
                jnp.maximum(jnp.max(jnp.abs(ref)), 1e-6))
    assert err < 2e-2, f"mismatch vs reference: normalized max err {err:.3e}"

    print("KERNEL_OK")
</pallas_src>

<mosaic_0001>
module attributes {stable_mosaic.version = 11 : i64} {
  func.func @_fa_kernel(%arg0: i32, %arg1: i32, %arg2: memref<1x1x3x16xi32, #tpu.memory_space<vmem>>, %arg3: memref<1x16x32xf32, #tpu.memory_space<vmem>>, %arg4: memref<1x3x16x16xf32, #tpu.memory_space<vmem>>, %arg5: memref<1x16x32xf32, #tpu.memory_space<vmem>>, %arg6: memref<16x16xf32, #tpu.memory_space<vmem>>, %arg7: memref<16x1xf32, #tpu.memory_space<vmem>>) attributes {dimension_semantics = [#tpu.dimension_semantics<parallel>, #tpu.dimension_semantics<arbitrary>], iteration_bounds = array<i64: 2, 1>, scalar_prefetch = 0 : i64, scratch_operands = 2 : i64, tpu.core_type = #tpu.core_type<tc>, window_params = [{transform_indices = @transform_0, window_bounds = array<i64: 1, 1, 3, 16>}, {transform_indices = @transform_1, window_bounds = array<i64: 1, 16, 32>}, {transform_indices = @transform_2, window_bounds = array<i64: 1, 3, 16, 16>}, {transform_indices = @transform_3, window_bounds = array<i64: 1, 16, 32>}]} {
    %c0_i32 = arith.constant 0 : i32
    %0 = arith.cmpi eq, %arg1, %c0_i32 : i32
    %1 = arith.extui %0 : i1 to i32
    %c0_i32_0 = arith.constant 0 : i32
    %2 = arith.cmpi ne, %1, %c0_i32_0 : i32
    scf.if %2 {
      %cst_21 = arith.constant 0.000000e+00 : f32
      %32 = vector.broadcast %cst_21 : f32 to vector<16x16xf32>
      %c0_22 = arith.constant 0 : index
      %c0_23 = arith.constant 0 : index
      %33 = vector.load %arg6[%c0_22, %c0_23] : memref<16x16xf32, #tpu.memory_space<vmem>>, vector<16x16xf32>
      tpu.vector_store %arg6[%c0_22, %c0_23], %32 {strides = array<i32>} : memref<16x16xf32, #tpu.memory_space<vmem>>, vector<16x16xf32>,
      %cst_24 = arith.constant 0.000000e+00 : f32
      %34 = vector.broadcast %cst_24 : f32 to vector<16x1xf32>
      %c0_25 = arith.constant 0 : index
      %c0_26 = arith.constant 0 : index
      %35 = vector.load %arg7[%c0_25, %c0_26] : memref<16x1xf32, #tpu.memory_space<vmem>>, vector<16x1xf32>
      tpu.vector_store %arg7[%c0_25, %c0_26], %34 {strides = array<i32>} : memref<16x1xf32, #tpu.memory_space<vmem>>, vector<16x1xf32>,
    } else {
    }
    %c0 = arith.constant 0 : index
    %c0_1 = arith.constant 0 : index
    %c0_2 = arith.constant 0 : index
    %c0_3 = arith.constant 0 : index
    %3 = vector.load %arg2[%c0, %c0_1, %c0_2, %c0_3] : memref<1x1x3x16xi32, #tpu.memory_space<vmem>>, vector<1x1x3x16xi32>
    %4 = vector.shape_cast %3 : vector<1x1x3x16xi32> to vector<3x16xi32>
    %c0_4 = arith.constant 0 : index
    %c0_5 = arith.constant 0 : index
    %c0_6 = arith.constant 0 : index
    %c0_7 = arith.constant 0 : index
    %5 = vector.load %arg4[%c0_4, %c0_5, %c0_6, %c0_7] : memref<1x3x16x16xf32, #tpu.memory_space<vmem>>, vector<1x3x16x16xf32>
    %6 = vector.shape_cast %5 : vector<1x3x16x16xf32> to vector<3x16x16xf32>
    %7 = arith.truncf %6 : vector<3x16x16xf32> to vector<3x16x16xbf16>
    %8 = tpu.iota {dimensions = array<i32: 2>} : vector<1x1x16xi32>
    %9 = vector.shape_cast %4 : vector<3x16xi32> to vector<3x16x1xi32>
    %10 = vector.broadcast %8 : vector<1x1x16xi32> to vector<3x16x16xi32>
    %11 = vector.broadcast %9 : vector<3x16x1xi32> to vector<3x16x16xi32>
    %12 = arith.cmpi eq, %10, %11 : vector<3x16x16xi32>
    %13 = arith.extui %12 : vector<3x16x16xi1> to vector<3x16x16xi32>
    %14 = arith.sitofp %13 : vector<3x16x16xi32> to vector<3x16x16xf32>
    %15 = arith.truncf %14 : vector<3x16x16xf32> to vector<3x16x16xbf16>
    %cst = arith.constant dense<0.000000e+00> : vector<3x16x16xf32>
    %16 = tpu.matmul %7, %15, %cst {dimension_numbers = #tpu.dot_dimension_numbers<[2], [1], [1], [2], [0, 0, 0, 1, 1, 2], [0], [0]>} : vector<3x16x16xbf16>, vector<3x16x16xbf16>, vector<3x16x16xf32> -> vector<3x16x16xf32>
    %17 = vector.shape_cast %15 : vector<3x16x16xbf16> to vector<48x16xbf16>
    %18 = arith.truncf %16 : vector<3x16x16xf32> to vector<3x16x16xbf16>
    %19 = vector.shape_cast %18 : vector<3x16x16xbf16> to vector<48x16xbf16>
    %c0_8 = arith.constant 0 : index
    %c0_9 = arith.constant 0 : index
    %20 = vector.load %arg6[%c0_8, %c0_9] : memref<16x16xf32, #tpu.memory_space<vmem>>, vector<16x16xf32>
    %cst_10 = arith.constant dense<0.000000e+00> : vector<16x16xf32>
    %21 = tpu.matmul %17, %19, %cst_10 {dimension_numbers = #tpu.dot_dimension_numbers<[0], [0], [1], [1], [0, 1, 1, 1], [], []>} : vector<48x16xbf16>, vector<48x16xbf16>, vector<16x16xf32> -> vector<16x16xf32>
    %22 = arith.addf %20, %21 : vector<16x16xf32>
    %c0_11 = arith.constant 0 : index
    %c0_12 = arith.constant 0 : index
    %23 = vector.load %arg6[%c0_11, %c0_12] : memref<16x16xf32, #tpu.memory_space<vmem>>, vector<16x16xf32>
    tpu.vector_store %arg6[%c0_11, %c0_12], %22 {strides = array<i32>} : memref<16x16xf32, #tpu.memory_space<vmem>>, vector<16x16xf32>,
    %cst_13 = arith.constant 1.000000e+00 : bf16
    %24 = vector.broadcast %cst_13 : bf16 to vector<48x1xbf16>
    %c0_14 = arith.constant 0 : index
    %c0_15 = arith.constant 0 : index
    %25 = vector.load %arg7[%c0_14, %c0_15] : memref<16x1xf32, #tpu.memory_space<vmem>>, vector<16x1xf32>
    %cst_16 = arith.constant dense<0.000000e+00> : vector<16x1xf32>
    %26 = tpu.matmul %17, %24, %cst_16 {dimension_numbers = #tpu.dot_dimension_numbers<[0], [0], [1], [1], [0, 1, 1, 1], [], []>} : vector<48x16xbf16>, vector<48x1xbf16>, vector<16x1xf32> -> vector<16x1xf32>
    %27 = arith.addf %25, %26 : vector<16x1xf32>
    %c0_17 = arith.constant 0 : index
    %c0_18 = arith.constant 0 : index
    %28 = vector.load %arg7[%c0_17, %c0_18] : memref<16x1xf32, #tpu.memory_space<vmem>>, vector<16x1xf32>
    tpu.vector_store %arg7[%c0_17, %c0_18], %27 {strides = array<i32>} : memref<16x1xf32, #tpu.memory_space<vmem>>, vector<16x1xf32>,
    %c0_i32_19 = arith.constant 0 : i32
    %29 = arith.cmpi eq, %arg1, %c0_i32_19 : i32
    %30 = arith.extui %29 : i1 to i32
    %c0_i32_20 = arith.constant 0 : i32
    %31 = arith.cmpi ne, %30, %c0_i32_20 : i32
    scf.if %31 {
      %c0_21 = arith.constant 0 : index
      %c0_22 = arith.constant 0 : index
      %32 = vector.load %arg7[%c0_21, %c0_22] : memref<16x1xf32, #tpu.memory_space<vmem>>, vector<16x1xf32>
      %cst_23 = arith.constant 9.99999982E-15 : f32
      %33 = vector.broadcast %cst_23 : f32 to vector<16x1xf32>
      %34 = arith.addf %32, %33 : vector<16x1xf32>
      %35 = tpu.reciprocal %34 {approx = true} : vector<16x1xf32> -> vector<16x1xf32>
      %c0_24 = arith.constant 0 : index
      %c0_25 = arith.constant 0 : index
      %36 = vector.load %arg6[%c0_24, %c0_25] : memref<16x16xf32, #tpu.memory_space<vmem>>, vector<16x16xf32>
      %37 = vector.broadcast %35 : vector<16x1xf32> to vector<16x16xf32>
      %38 = arith.mulf %36, %37 : vector<16x16xf32>
      %39 = arith.truncf %38 : vector<16x16xf32> to vector<16x16xbf16>
      %c0_26 = arith.constant 0 : index
      %c0_27 = arith.constant 0 : index
      %c0_28 = arith.constant 0 : index
      %40 = vector.load %arg3[%c0_26, %c0_27, %c0_28] : memref<1x16x32xf32, #tpu.memory_space<vmem>>, vector<1x16x32xf32>
      %41 = vector.shape_cast %40 : vector<1x16x32xf32> to vector<16x32xf32>
      %42 = arith.truncf %41 : vector<16x32xf32> to vector<16x32xbf16>
      %cst_29 = arith.constant dense<0.000000e+00> : vector<16x32xf32>
      %43 = tpu.matmul %39, %42, %cst_29 {dimension_numbers = #tpu.dot_dimension_numbers<[1], [0], [0], [1], [0, 0, 1, 1], [], []>} : vector<16x16xbf16>, vector<16x32xbf16>, vector<16x32xf32> -> vector<16x32xf32>
      %c0_30 = arith.constant 0 : index
      %c0_31 = arith.constant 0 : index
      %c0_32 = arith.constant 0 : index
      %44 = vector.load %arg5[%c0_30, %c0_31, %c0_32] : memref<1x16x32xf32, #tpu.memory_space<vmem>>, vector<1x16x32xf32>
      %45 = vector.shape_cast %44 : vector<1x16x32xf32> to vector<16x32xf32>
      %46 = vector.shape_cast %43 : vector<16x32xf32> to vector<1x16x32xf32>
      tpu.vector_store %arg5[%c0_30, %c0_31, %c0_32], %46 {strides = array<i32>} : memref<1x16x32xf32, #tpu.memory_space<vmem>>, vector<1x16x32xf32>,
    } else {
    }
    return
  }
  func.func @transform_0(%arg0: i32, %arg1: i32) -> (i32, i32, i32, i32) {
    %c0_i32 = arith.constant 0 : i32
    %c0_i32_0 = arith.constant 0 : i32
    %c0_i32_1 = arith.constant 0 : i32
    return %arg0, %arg1, %c0_i32, %c0_i32_0 : i32, i32, i32, i32
  }
  func.func @transform_1(%arg0: i32, %arg1: i32) -> (i32, i32, i32) {
    %c0_i32 = arith.constant 0 : i32
    %c0_i32_0 = arith.constant 0 : i32
    %c0_i32_1 = arith.constant 0 : i32
    return %arg0, %c0_i32, %c0_i32_0 : i32, i32, i32
  }
  func.func @transform_2(%arg0: i32, %arg1: i32) -> (i32, i32, i32, i32) {
    %c0_i32 = arith.constant 0 : i32
    %c0_i32_0 = arith.constant 0 : i32
    %c0_i32_1 = arith.constant 0 : i32
    return %arg0, %arg1, %c0_i32, %c0_i32_0 : i32, i32, i32, i32
  }
  func.func @transform_3(%arg0: i32, %arg1: i32) -> (i32, i32, i32) {
    %c0_i32 = arith.constant 0 : i32
    %c0_i32_0 = arith.constant 0 : i32
    %c0_i32_1 = arith.constant 0 : i32
    return %arg0, %c0_i32, %c0_i32_0 : i32, i32, i32
  }
}

</mosaic_0001>

<llo_original>
// kernel: tpu_custom_call.1
$region0: #{tpu_custom_call.1}
  #allocation0 [shape = 'u32[]', space=smem, size = 0x4, offset = 0x4, fixed_abs, tag = 'smem constant byte address 0x4 - core index']
  #allocation1 [shape = 'u32[144,128]{1,0:T(1,128)}', space=vmem, size = 0x12000, scoped, tag = 'internal scratch']
  #allocation2 [shape = 'f32[16,16]{1,0:T(8,128)}', space=vmem, size = 0x2000, scoped, tag = 'scratch operand']
  #allocation3 [shape = 'f32[16,1]{1,0:T(8,128)}', space=vmem, size = 0x2000, scoped, tag = 'scratch operand']
  %s0 = inlined_call_operand.vmem [shape: s32[2,1,3,16], index: 0, kind: input, shape index: {}]
  %s1 = inlined_call_operand.hbm [shape: f32[2,16,32], index: 1, kind: input, shape index: {}]
  %s2 = inlined_call_operand.hbm [shape: f32[2,3,16,16], index: 2, kind: input, shape index: {}]
  %s3 = inlined_call_operand.hbm [shape: f32[2,16,32], index: 3, kind: output, shape index: {}]
  %s4 = sld [smem:[#allocation0]]
  $region61: #{tpu_custom_call.1} parent=0
    _
  %s6 = ssub.s32 1, %s4
  %s7 = scalar_select 0, %s6, %s4
  $region1: #{tpu_custom_call.1} parent=0
    #allocation4 [shape = 'u8[16384]{0}', space=vmem, size = 0x4000, scoped, tag = 'input window, operand 1']
    #allocation5 [shape = 's32[2]{0}', space=sflag, size = 0x8, scoped, tag = 'scoped memory for tpu_custom_call.1']
    #allocation6 [shape = 's32[2]{0}', space=sflag, size = 0x8, scoped, tag = 'scoped memory for tpu_custom_call.1']
    #allocation7 [shape = 'u8[49152]{0}', space=vmem, size = 0xc000, scoped, tag = 'input window, operand 2']
    #allocation8 [shape = 's32[2]{0}', space=sflag, size = 0x8, scoped, tag = 'scoped memory for tpu_custom_call.1']
    #allocation9 [shape = 'u8[16384]{0}', space=vmem, size = 0x4000, scoped, tag = 'output window, operand 0']
    %8 = vsyncpa [#allocation5], 0
    %s9 = scalar_lea.sflag [#allocation5], 1
    %10 = vsyncpa %s9, 0
    %11 = vsyncpa [#allocation8], 0
    %s12 = scalar_lea.sflag [#allocation8], 1
    %13 = vsyncpa %s12, 0
    %14 = vsyncpa [#allocation6], 0
    %s15 = scalar_lea.sflag [#allocation6], 1
    %16 = vsyncpa %s15, 0
    loop: start=0, step=1, limit=4
    $region2: #{tpu_custom_call.1} parent=1 // loop_pre_header
      _
    $region3: #{tpu_custom_call.1} parent=1 // loop_header
      %s18 = sphi 0, %s22
      %p19 = scmp.ge.s32.totalorder %s18, 4
      %s25 = sphi 0, %s37
      %s26 = sphi 0, %s33
      %s27 = sphi 0, %s25
      %s28 = sphi 0, %s26
      %s29 = sphi 0, %s27
      %s30 = sphi 0, %s28
      %s42 = sphi 0, %s44
      %s45 = sphi 0, %s42
      %s46 = sphi 0, %s45
      %s62 = sphi 0, %s46
      %s68 = sphi 0, %s70
      %s71 = sphi 0, %s68
      %s72 = sphi 0, %s71
      %s88 = sphi 0, %s72
      %s96 = sphi 0, %s98
      %s99 = sphi 0, %s96
      %s100 = sphi 0, %s99
      %s116 = sphi 0, %s100
      %s122 = sphi 0, %s124
      %s125 = sphi 0, %s122
      %s126 = sphi 0, %s125
      %s142 = sphi 0, %s126
    $region4: #{tpu_custom_call.1} parent=1 // loop_header_branch
      %21 = sbr.rel (%p19) target = $region8
    $region5: #{tpu_custom_call.1} parent=1 // loop_body
      %s23 = ssub.s32 %s18, 1
      %s24 = ssub.s32 %s18, 2
      %s31 = sadd.s32 1, %s26
      %p32 = scmp.ge.s32.totalorder %s31, 1
      %s33 = scalar_select %p32, 0, %s31
      %s34 = sadd.s32 1, %s25
      %s35 = scalar_select %p32, %s34, %s25
      %p36 = scmp.ge.s32.totalorder %s35, 2
      %s37 = scalar_select %p36, 0, %s35
      %s38 = ssub.s32 %s25, %s37
      %s39 = ssub.s32 %s26, %s33
      %s40 = sor.u32 %s38, %s39
      %p41 = scmp.eq.s32.totalorder %s40, 0
      %s43 = sadd.s32 %s42, 1
      %s44 = scalar_select %p41, %s42, %s43
      %p47 = pneg %p41
      %p48 = scmp.eq.s32.totalorder %s18, 1
      %p49 = por %p47, %p48
      %p50 = scmp.ne.s32.totalorder %s42, %s45
      %p51 = scmp.eq.s32.totalorder %s18, 0
      %p52 = por %p50, %p51
      %p53 = scmp.ne.s32.totalorder %s42, %s45
      %p54 = scmp.eq.s32.totalorder %s23, 1
      %p55 = por %p53, %p54
      %p56 = scmp.ne.s32.totalorder %s45, %s46
      %p57 = scmp.eq.s32.totalorder %s23, 0
      %p58 = por %p56, %p57
      %p59 = scmp.ne.s32.totalorder %s45, %s46
      %p60 = scmp.eq.s32.totalorder %s24, 1
      %p61 = por %p59, %p60
      %p63 = scmp.ne.s32.totalorder %s46, %s62
      %p64 = scmp.eq.s32.totalorder %s24, 0
      %p65 = por %p63, %p64
      %s66 = ssub.s32 %s25, %s37
      %p67 = scmp.eq.s32.totalorder %s66, 0
      %s69 = sadd.s32 %s68, 1
      %s70 = scalar_select %p67, %s68, %s69
      %p73 = pneg %p67
      %p74 = scmp.eq.s32.totalorder %s18, 1
      %p75 = por %p73, %p74
      %p76 = scmp.ne.s32.totalorder %s68, %s71
      %p77 = scmp.eq.s32.totalorder %s18, 0
      %p78 = por %p76, %p77
      %p79 = scmp.ne.s32.totalorder %s68, %s71
      %p80 = scmp.eq.s32.totalorder %s23, 1
      %p81 = por %p79, %p80
      %p82 = scmp.ne.s32.totalorder %s71, %s72
      %p83 = scmp.eq.s32.totalorder %s23, 0
      %p84 = por %p82, %p83
      %p85 = scmp.ne.s32.totalorder %s71, %s72
      %p86 = scmp.eq.s32.totalorder %s24, 1
      %p87 = por %p85, %p86
      %p89 = scmp.ne.s32.totalorder %s72, %s88
      %p90 = scmp.eq.s32.totalorder %s24, 0
      %p91 = por %p89, %p90
      %s92 = ssub.s32 %s25, %s37
      %s93 = ssub.s32 %s26, %s33
      %s94 = sor.u32 %s92, %s93
      %p95 = scmp.eq.s32.totalorder %s94, 0
      %s97 = sadd.s32 %s96, 1
      %s98 = scalar_select %p95, %s96, %s97
      %p101 = pneg %p95
      %p102 = scmp.eq.s32.totalorder %s18, 1
      %p103 = por %p101, %p102
      %p104 = scmp.ne.s32.totalorder %s96, %s99
      %p105 = scmp.eq.s32.totalorder %s18, 0
      %p106 = por %p104, %p105
      %p107 = scmp.ne.s32.totalorder %s96, %s99
      %p108 = scmp.eq.s32.totalorder %s23, 1
      %p109 = por %p107, %p108
      %p110 = scmp.ne.s32.totalorder %s99, %s100
      %p111 = scmp.eq.s32.totalorder %s23, 0
      %p112 = por %p110, %p111
      %p113 = scmp.ne.s32.totalorder %s99, %s100
      %p114 = scmp.eq.s32.totalorder %s24, 1
      %p115 = por %p113, %p114
      %p117 = scmp.ne.s32.totalorder %s100, %s116
      %p118 = scmp.eq.s32.totalorder %s24, 0
      %p119 = por %p117, %p118
      %s120 = ssub.s32 %s25, %s37
      %p121 = scmp.eq.s32.totalorder %s120, 0
      %s123 = sadd.s32 %s122, 1
      %s124 = scalar_select %p121, %s122, %s123
      %p127 = pneg %p121
      %p128 = scmp.eq.s32.totalorder %s18, 1
      %p129 = por %p127, %p128
      %p130 = scmp.ne.s32.totalorder %s122, %s125
      %p131 = scmp.eq.s32.totalorder %s18, 0
      %p132 = por %p130, %p131
      %p133 = scmp.ne.s32.totalorder %s122, %s125
      %p134 = scmp.eq.s32.totalorder %s23, 1
      %p135 = por %p133, %p134
      %p136 = scmp.ne.s32.totalorder %s125, %s126
      %p137 = scmp.eq.s32.totalorder %s23, 0
      %p138 = por %p136, %p137
      %p139 = scmp.ne.s32.totalorder %s125, %s126
      %p140 = scmp.eq.s32.totalorder %s24, 1
      %p141 = por %p139, %p140
      %p143 = scmp.ne.s32.totalorder %s126, %s142
      %p144 = scmp.eq.s32.totalorder %s24, 0
      %p145 = por %p143, %p144
      %p146 = scmp.le.s32.totalorder 1, %s18
      %p147 = scmp.lt.s32.totalorder %s18, 3
      %p148 = pnand %p146, %p147
      %p149 = pneg %p148
      // Predicated region
      $region9: #{tpu_custom_call.1} parent=5 // pred_check
        _
      $region10: #{tpu_custom_call.1} parent=5 // pred_check_branch
        %151 = sbr.rel (%p148) target = $region12
      $region11: #{tpu_custom_call.1} parent=5 // pred_region
        %s152 = ssub.s32 %s18, 1
      $region12: #{tpu_custom_call.1} parent=5 // pred_fallthru
        _
      %p153 = scmp.lt.s32.totalorder %s18, 2
      // Predicated region
      $region13: #{tpu_custom_call.1} parent=5 // pred_check
        %p154 = pneg %p153
      $region14: #{tpu_custom_call.1} parent=5 // pred_check_branch
        %156 = sbr.rel (%p154) target = $region16
      $region15: #{tpu_custom_call.1} parent=5 // pred_region
        // Predicated region
        $region17: #{tpu_custom_call.1} parent=15 // pred_check
          %p157 = pneg %p52
        $region18: #{tpu_custom_call.1} parent=15 // pred_check_branch
          %159 = sbr.rel (%p157) target = $region20
        $region19: #{tpu_custom_call.1} parent=15 // pred_region
          %p160 = scmp.lt.s32.totalorder %s25, 1
          %s161 = scalar_select %p160, %s25, 1
          %p162 = scmp.lt.s32.totalorder %s26, 0
          %s163 = scalar_select %p162, %s26, 0
          %s164 = sadd.s32 %s163, %s161
          %s165 = smul.addr %s164, 4
          %s166 = scalar_lea.vmem %s0, %s165
        $region20: #{tpu_custom_call.1} parent=15 // pred_fallthru
          _
        // Predicated region
        $region21: #{tpu_custom_call.1} parent=15 // pred_check
          %p167 = pneg %p78
        $region22: #{tpu_custom_call.1} parent=15 // pred_check_branch
          %169 = sbr.rel (%p167) target = $region24
        $region23: #{tpu_custom_call.1} parent=15 // pred_region
          %s170 = sand.u32 %s68, 1
          %s171 = scalar_lea.sflag [#allocation5], %s170
          %s172 = sand.u32 %s68, 1
          %s173 = smul.addr %s172, 16
          %s174 = scalar_lea.vmem [#allocation4], %s173
          %s176 = ssub.s32 256, 256
          %177 = vsyncadd %s171, %s176
          %s178 = smul.addr %s25, 2
          %s179 = smul.addr %s178, 128
          %s180 = scalar_lea.hbm %s1, %s179
          %s181 = sshll.u32 %s174, 4
          %s182 = int_to_ptr.vmem [resolvable:$true] %s181
          %187 = dma.hbm_to_vmem [thread:$0]  %s180, 256, %s182, %s171, 128, 128, 8
        $region24: #{tpu_custom_call.1} parent=15 // pred_fallthru
          _
        // Predicated region
        $region25: #{tpu_custom_call.1} parent=15 // pred_check
          %p188 = pneg %p106
        $region26: #{tpu_custom_call.1} parent=15 // pred_check_branch
          %190 = sbr.rel (%p188) target = $region28
        $region27: #{tpu_custom_call.1} parent=15 // pred_region
          %s191 = sand.u32 %s96, 1
          %s192 = scalar_lea.sflag [#allocation8], %s191
          %s193 = sand.u32 %s96, 1
          %s194 = smul.addr %s193, 48
          %s195 = scalar_lea.vmem [#allocation7], %s194
          %s196 = smul.u32 3, %s26
          %s198 = ssub.s32 768, 768
          %199 = vsyncadd %s192, %s198
          %s200 = smul.addr %s196, 2
          %s201 = smul.addr %s25, 6
          %s202 = sadd.s32 %s200, %s201
          %s203 = smul.addr %s202, 128
          %s204 = scalar_lea.hbm %s2, %s203
          %s205 = sshll.u32 %s195, 4
          %s206 = int_to_ptr.vmem [resolvable:$true] %s205
          %211 = dma.hbm_to_vmem [thread:$0]  %s204, 768, %s206, %s192, 128, 128, 8
        $region28: #{tpu_custom_call.1} parent=15 // pred_fallthru
          _
      $region16: #{tpu_custom_call.1} parent=5 // pred_fallthru
        _
      %p212 = scmp.le.s32.totalorder 1, %s18
      %p213 = scmp.lt.s32.totalorder %s18, 3
      %p214 = pnand %p212, %p213
      %p215 = pneg %p214
      // Predicated region
      $region29: #{tpu_custom_call.1} parent=5 // pred_check
        _
      $region30: #{tpu_custom_call.1} parent=5 // pred_check_branch
        %217 = sbr.rel (%p214) target = $region32
      $region31: #{tpu_custom_call.1} parent=5 // pred_region
        %s218 = ssub.s32 %s18, 1
        %s219 = sand.u32 %s71, 1
        %s220 = scalar_lea.sflag [#allocation5], %s219
        %s221 = sand.u32 %s71, 1
        %s222 = smul.addr %s221, 16
        %s223 = scalar_lea.vmem [#allocation4], %s222
        // Predicated region
        $region33: #{tpu_custom_call.1} parent=31 // pred_check
          %p224 = pneg %p84
        $region34: #{tpu_custom_call.1} parent=31 // pred_check_branch
          %226 = sbr.rel (%p224) target = $region36
        $region35: #{tpu_custom_call.1} parent=31 // pred_region
          %227 = dma.done %s220, 256
        $region36: #{tpu_custom_call.1} parent=31 // pred_fallthru
          _
        %s228 = sand.u32 %s99, 1
        %s229 = scalar_lea.sflag [#allocation8], %s228
        %s230 = sand.u32 %s99, 1
        %s231 = smul.addr %s230, 48
        %s232 = scalar_lea.vmem [#allocation7], %s231
        // Predicated region
        $region37: #{tpu_custom_call.1} parent=31 // pred_check
          %p233 = pneg %p112
        $region38: #{tpu_custom_call.1} parent=31 // pred_check_branch
          %235 = sbr.rel (%p233) target = $region40
        $region39: #{tpu_custom_call.1} parent=31 // pred_region
          %236 = dma.done %s229, 768
        $region40: #{tpu_custom_call.1} parent=31 // pred_fallthru
          _
        %p237 = scmp.lt.s32.totalorder %s27, 1
        %s238 = scalar_select %p237, %s27, 1
        %p239 = scmp.lt.s32.totalorder %s28, 0
        %s240 = scalar_select %p239, %s28, 0
        %s241 = sadd.s32 %s240, %s238
        %s242 = smul.addr %s241, 4
        %s243 = scalar_lea.vmem %s0, %s242
        %p244 = pneg %p58
        %p245 = pneg %p55
        %s246 = sand.u32 %s71, 1
        %s247 = scalar_lea.sflag [#allocation5], %s246
        %s248 = sand.u32 %s71, 1
        %s249 = smul.addr %s248, 16
        %s250 = scalar_lea.vmem [#allocation4], %s249
        %p251 = pneg %p84
        %p252 = pneg %p81
        %s253 = sand.u32 %s99, 1
        %s254 = scalar_lea.sflag [#allocation8], %s253
        %s255 = sand.u32 %s99, 1
        %s256 = smul.addr %s255, 48
        %s257 = scalar_lea.vmem [#allocation7], %s256
        %p258 = pneg %p112
        %p259 = pneg %p109
        %p260 = pneg %p138
        %p261 = pneg %p135
        %s262 = sand.u32 %s125, 1
        %s263 = scalar_lea.sflag [#allocation6], %s262
        %s264 = sand.u32 %s125, 1
        %s265 = smul.addr %s264, 16
        %s266 = scalar_lea.vmem [#allocation9], %s265
        %p267 = scmp.lt.s32.totalorder %s27, 1
        %s268 = scalar_select %p267, %s27, 1
        %p269 = scmp.lt.s32.totalorder %s28, 0
        %s270 = scalar_select %p269, %s28, 0
        %s271 = sadd.s32 %s270, %s268
        %s272 = smul.addr %s271, 4
        %s273 = scalar_lea.vmem %s0, %s272
        %s274 = smul.u32 3, %s28
        %p277 = scmp.eq.s32.totalorder %s28, 0
        // Predicated region
        $region41: #{tpu_custom_call.1} parent=31 // pred_check
          %p278 = pneg %p277
        $region42: #{tpu_custom_call.1} parent=31 // pred_check_branch
          %280 = sbr.rel (%p278) target = $region44
        $region43: #{tpu_custom_call.1} parent=31 // pred_region
          %vm281 = vcmask 130048
          %282 = vst.msk [vmem:[#allocation2] sm:$0xff] %vm281, 0.0
          %283 = vst.msk [vmem:[#allocation2 + $0x8] sm:$0xff] %vm281, 0.0
          %vm284 = vcmask 7168
          %285 = vst.msk [vmem:[#allocation3] sm:$0xff] %vm284, 0.0
          %286 = vst.msk [vmem:[#allocation3 + $0x8] sm:$0xff] %vm284, 0.0
        $region44: #{tpu_custom_call.1} parent=31 // pred_fallthru
          _
        %v287 = vld [vmem:[%s273] sm:$0x7]
        %v288 = vld [vmem:[%s232] sm:$0xff]
        %v289 = vld [vmem:[%s232 + $0x8] sm:$0xff]
        %v290 = vld [vmem:[%s232 + $0x10] sm:$0xff]
        %v291 = vld [vmem:[%s232 + $0x18] sm:$0xff]
        %v292 = vld [vmem:[%s232 + $0x20] sm:$0xff]
        %v293 = vld [vmem:[%s232 + $0x28] sm:$0xff]
        %v294 = vpack.c.bf16 %v289, %v288
        %v295 = vpack.c.bf16 %v291, %v290
        %v296 = vpack.c.bf16 %v293, %v292
        %v297 = vlaneseq
        %v298 = vand.u32 %v297, 127
        %v299 = vlaneseq
        %v300 = vshrl.u32 %v299, 7
        %v301 = vsub.s32 0, %v300
        %v302 = vrot.slane %v287, %v301
        %304 = vbcast.lane.b32.xlu0 %v302, 256
        %v305 = vpop.permute.xlu0 %304
        %s307 = sor.u32 256, 8
        %308 = vbcast.lane.b32.xlu0 %v302, %s307
        %v309 = vpop.permute.xlu0 %308
        %v310 = vlaneseq
        %v311 = vshrl.u32 %v310, 7
        %v312 = vsub.s32 1, %v311
        %v313 = vrot.slane %v287, %v312
        %315 = vbcast.lane.b32.xlu0 %v313, 256
        %v316 = vpop.permute.xlu0 %315
        %s318 = sor.u32 256, 8
        %319 = vbcast.lane.b32.xlu0 %v313, %s318
        %v320 = vpop.permute.xlu0 %319
        %v321 = vlaneseq
        %v322 = vshrl.u32 %v321, 7
        %v323 = vsub.s32 2, %v322
        %v324 = vrot.slane %v287, %v323
        %326 = vbcast.lane.b32.xlu0 %v324, 256
        %v327 = vpop.permute.xlu0 %326
        %s329 = sor.u32 256, 8
        %330 = vbcast.lane.b32.xlu0 %v324, %s329
        %v331 = vpop.permute.xlu0 %330
        %vm332 = vcmp.eq.s32.totalorder %v298, %v305
        %vm333 = vcmp.eq.s32.totalorder %v298, %v309
        %vm334 = vcmp.eq.s32.totalorder %v298, %v316
        %vm335 = vcmp.eq.s32.totalorder %v298, %v320
        %vm336 = vcmp.eq.s32.totalorder %v298, %v327
        %vm337 = vcmp.eq.s32.totalorder %v298, %v331
        %v338 = vsel %vm332, 1, 0
        %v339 = vsel %vm333, 1, 0
        %v340 = vsel %vm334, 1, 0
        %v341 = vsel %vm335, 1, 0
        %v342 = vsel %vm336, 1, 0
        %v343 = vsel %vm337, 1, 0
        %v344 = vcvt.s32.f32 %v338
        %v345 = vcvt.s32.f32 %v339
        %v346 = vcvt.s32.f32 %v340
        %v347 = vcvt.s32.f32 %v341
        %v348 = vcvt.s32.f32 %v342
        %v349 = vcvt.s32.f32 %v343
        %v350 = vpack.c.bf16 %v345, %v344
        %v351 = vpack.c.bf16 %v347, %v346
        %v352 = vpack.c.bf16 %v349, %v348
        %vm353 = vcmask 130048
        %v355 = vsel %vm353, %v294, 0
        %357 = vmatprep.subr.bf16.mxu0 0
        %358 = vmatpush1.bf16.msra.mxu0 0
        %359 = vmatprep.subr.bf16.mxu0 0
        %360 = vmatpush1.bf16.msra.mxu0 0
        %361 = vmatprep.subr.bf16.mxu0 0
        %362 = vmatpush1.bf16.msra.mxu0 0
        %363 = vmatprep.subr.bf16.mxu0 0
        %364 = vmatpush1.bf16.msra.mxu0 0
        %365 = vmatprep.subr.bf16.mxu0 0
        %366 = vmatpush1.bf16.msra.mxu0 0
        %367 = vmatprep.subr.bf16.mxu0 0
        %368 = vmatpush1.bf16.msra.mxu0 0
        %369 = vmatprep.subr.bf16.mxu0 0
        %370 = vmatpush1.bf16.msra.mxu0 0
        %371 = vmatprep.subr.bf16.mxu0 0
        %372 = vmatpush1.bf16.msra.mxu0 %v350
        %373 = vmatprep.subr.bf16.mxu0 0
        %374 = vmatpush2.bf16.msra.mxu0 0
        %375 = vmatprep.subr.bf16.mxu0 0
        %376 = vmatpush2.bf16.msra.mxu0 0
        %377 = vmatprep.subr.bf16.mxu0 0
        %378 = vmatpush2.bf16.msra.mxu0 0
        %379 = vmatprep.subr.bf16.mxu0 0
        %380 = vmatpush2.bf16.msra.mxu0 0
        %381 = vmatprep.subr.bf16.mxu0 0
        %382 = vmatpush2.bf16.msra.mxu0 0
        %383 = vmatprep.subr.bf16.mxu0 0
        %384 = vmatpush2.bf16.msra.mxu0 0
        %385 = vmatprep.subr.bf16.mxu0 0
        %386 = vmatpush2.bf16.msra.mxu0 0
        %387 = vmatprep.subr.bf16.mxu0 0
        %388 = vmatpush2.bf16.msra.mxu0 0
        %389 = vmatprep.mubr.bf16.mxu0 0
        %390 = vmatmul.mubr.bf16.gmra.mxu0 %v355
        %v391 = vpop.f32.mrf.mxu0
        %v392 = vadd.f32 0.0, %v391
        %v393 = vpop.f32.mrf.mxu0
        %v394 = vpop.f32.mrf.mxu0
        %v395 = vadd.f32 0.0, %v394
        %v396 = vpop.f32.mrf.mxu0
        %397 = vdwg.mxu0
        %v399 = vsel %vm353, %v295, 0
        %401 = vmatprep.subr.bf16.mxu0 0
        %402 = vmatpush1.bf16.msra.mxu0 0
        %403 = vmatprep.subr.bf16.mxu0 0
        %404 = vmatpush1.bf16.msra.mxu0 0
        %405 = vmatprep.subr.bf16.mxu0 0
        %406 = vmatpush1.bf16.msra.mxu0 0
        %407 = vmatprep.subr.bf16.mxu0 0
        %408 = vmatpush1.bf16.msra.mxu0 0
        %409 = vmatprep.subr.bf16.mxu0 0
        %410 = vmatpush1.bf16.msra.mxu0 0
        %411 = vmatprep.subr.bf16.mxu0 0
        %412 = vmatpush1.bf16.msra.mxu0 0
        %413 = vmatprep.subr.bf16.mxu0 0
        %414 = vmatpush1.bf16.msra.mxu0 0
        %415 = vmatprep.subr.bf16.mxu0 0
        %416 = vmatpush1.bf16.msra.mxu0 %v351
        %417 = vmatprep.subr.bf16.mxu0 0
        %418 = vmatpush2.bf16.msra.mxu0 0
        %419 = vmatprep.subr.bf16.mxu0 0
        %420 = vmatpush2.bf16.msra.mxu0 0
        %421 = vmatprep.subr.bf16.mxu0 0
        %422 = vmatpush2.bf16.msra.mxu0 0
        %423 = vmatprep.subr.bf16.mxu0 0
        %424 = vmatpush2.bf16.msra.mxu0 0
        %425 = vmatprep.subr.bf16.mxu0 0
        %426 = vmatpush2.bf16.msra.mxu0 0
        %427 = vmatprep.subr.bf16.mxu0 0
        %428 = vmatpush2.bf16.msra.mxu0 0
        %429 = vmatprep.subr.bf16.mxu0 0
        %430 = vmatpush2.bf16.msra.mxu0 0
        %431 = vmatprep.subr.bf16.mxu0 0
        %432 = vmatpush2.bf16.msra.mxu0 0
        %433 = vmatprep.mubr.bf16.mxu0 0
        %434 = vmatmul.mubr.bf16.gmra.mxu0 %v399
        %v435 = vpop.f32.mrf.mxu0
        %v436 = vadd.f32 0.0, %v435
        %v437 = vpop.f32.mrf.mxu0
        %v438 = vpop.f32.mrf.mxu0
        %v439 = vadd.f32 0.0, %v438
        %v440 = vpop.f32.mrf.mxu0
        %441 = vdwg.mxu0
        %v443 = vsel %vm353, %v296, 0
        %445 = vmatprep.subr.bf16.mxu0 0
        %446 = vmatpush1.bf16.msra.mxu0 0
        %447 = vmatprep.subr.bf16.mxu0 0
        %448 = vmatpush1.bf16.msra.mxu0 0
        %449 = vmatprep.subr.bf16.mxu0 0
        %450 = vmatpush1.bf16.msra.mxu0 0
        %451 = vmatprep.subr.bf16.mxu0 0
        %452 = vmatpush1.bf16.msra.mxu0 0
        %453 = vmatprep.subr.bf16.mxu0 0
        %454 = vmatpush1.bf16.msra.mxu0 0
        %455 = vmatprep.subr.bf16.mxu0 0
        %456 = vmatpush1.bf16.msra.mxu0 0
        %457 = vmatprep.subr.bf16.mxu0 0
        %458 = vmatpush1.bf16.msra.mxu0 0
        %459 = vmatprep.subr.bf16.mxu0 0
        %460 = vmatpush1.bf16.msra.mxu0 %v352
        %461 = vmatprep.subr.bf16.mxu0 0
        %462 = vmatpush2.bf16.msra.mxu0 0
        %463 = vmatprep.subr.bf16.mxu0 0
        %464 = vmatpush2.bf16.msra.mxu0 0
        %465 = vmatprep.subr.bf16.mxu0 0
        %466 = vmatpush2.bf16.msra.mxu0 0
        %467 = vmatprep.subr.bf16.mxu0 0
        %468 = vmatpush2.bf16.msra.mxu0 0
        %469 = vmatprep.subr.bf16.mxu0 0
        %470 = vmatpush2.bf16.msra.mxu0 0
        %471 = vmatprep.subr.bf16.mxu0 0
        %472 = vmatpush2.bf16.msra.mxu0 0
        %473 = vmatprep.subr.bf16.mxu0 0
        %474 = vmatpush2.bf16.msra.mxu0 0
        %475 = vmatprep.subr.bf16.mxu0 0
        %476 = vmatpush2.bf16.msra.mxu0 0
        %477 = vmatprep.mubr.bf16.mxu0 0
        %478 = vmatmul.mubr.bf16.gmra.mxu0 %v443
        %v479 = vpop.f32.mrf.mxu0
        %v480 = vadd.f32 0.0, %v479
        %v481 = vpop.f32.mrf.mxu0
        %v482 = vpop.f32.mrf.mxu0
        %v483 = vadd.f32 0.0, %v482
        %v484 = vpop.f32.mrf.mxu0
        %485 = vdwg.mxu0
        %v486 = vpack.c.bf16 %v395, %v392
        %v487 = vpack.c.bf16 %v439, %v436
        %v488 = vpack.c.bf16 %v483, %v480
        %v489 = vld [vmem:[#allocation2] sm:$0xff]
        %v490 = vld [vmem:[#allocation2 + $0x8] sm:$0xff]
        %491 = vxpose.xlu0.c.b16.start [1/8] %v350, 128
        %492 = vxpose.xlu0.c.b16.cont [2/8] %v351, 128
        %493 = vxpose.xlu0.c.b16.cont [3/8] %v352, 128
        %494 = vxpose.xlu0.c.b16.cont [4/8] 0, 128
        %495 = vxpose.xlu0.c.b16.cont [5/8] 0, 128
        %496 = vxpose.xlu0.c.b16.cont [6/8] 0, 128
        %497 = vxpose.xlu0.c.b16.cont [7/8] 0, 128
        %498 = vxpose.xlu0.c.b16.end [8/8] 0, 128
        %v499 = vpop.trf.xlu0
        %v500 = vpop.trf.xlu0
        %v501 = vpop.trf.xlu0
        %v502 = vpop.trf.xlu0
        %v503 = vpop.trf.xlu0
        %v504 = vpop.trf.xlu0
        %v505 = vpop.trf.xlu0
        %v506 = vpop.trf.xlu0
        %vm507 = vcmask 392192
        %v509 = vsel %vm507, %v499, 0
        %511 = vmatprep.subr.bf16.mxu0 0
        %512 = vmatpush1.bf16.msra.mxu0 0
        %513 = vmatprep.subr.bf16.mxu0 0
        %514 = vmatpush1.bf16.msra.mxu0 0
        %515 = vmatprep.subr.bf16.mxu0 0
        %516 = vmatpush1.bf16.msra.mxu0 0
        %517 = vmatprep.subr.bf16.mxu0 0
        %518 = vmatpush1.bf16.msra.mxu0 0
        %519 = vmatprep.subr.bf16.mxu0 0
        %520 = vmatpush1.bf16.msra.mxu0 0
        %521 = vmatprep.subr.bf16.mxu0 0
        %522 = vmatpush1.bf16.msra.mxu0 %v488
        %523 = vmatprep.subr.bf16.mxu0 0
        %524 = vmatpush1.bf16.msra.mxu0 %v487
        %525 = vmatprep.subr.bf16.mxu0 0
        %526 = vmatpush1.bf16.msra.mxu0 %v486
        %527 = vmatprep.subr.bf16.mxu0 0
        %528 = vmatpush2.bf16.msra.mxu0 0
        %529 = vmatprep.subr.bf16.mxu0 0
        %530 = vmatpush2.bf16.msra.mxu0 0
        %531 = vmatprep.subr.bf16.mxu0 0
        %532 = vmatpush2.bf16.msra.mxu0 0
        %533 = vmatprep.subr.bf16.mxu0 0
        %534 = vmatpush2.bf16.msra.mxu0 0
        %535 = vmatprep.subr.bf16.mxu0 0
        %536 = vmatpush2.bf16.msra.mxu0 0
        %537 = vmatprep.subr.bf16.mxu0 0
        %538 = vmatpush2.bf16.msra.mxu0 0
        %539 = vmatprep.subr.bf16.mxu0 0
        %540 = vmatpush2.bf16.msra.mxu0 0
        %541 = vmatprep.subr.bf16.mxu0 0
        %542 = vmatpush2.bf16.msra.mxu0 0
        %543 = vmatprep.mubr.bf16.mxu0 0
        %544 = vmatmul.mubr.bf16.gmra.mxu0 %v509
        %v545 = vpop.f32.mrf.mxu0
        %v546 = vadd.f32 0.0, %v545
        %v547 = vpop.f32.mrf.mxu0
        %v548 = vpop.f32.mrf.mxu0
        %v549 = vadd.f32 0.0, %v548
        %v550 = vpop.f32.mrf.mxu0
        %551 = vdwg.mxu0
        %v552 = vadd.f32 %v489, %v546
        %v553 = vadd.f32 %v490, %v549
        %554 = vst.msk [vmem:[#allocation2] sm:$0xff] %vm353, %v552
        %555 = vst.msk [vmem:[#allocation2 + $0x8] sm:$0xff] %vm353, %v553
        %v556 = vld [vmem:[#allocation3] sm:$0xff]
        %v557 = vld [vmem:[#allocation3 + $0x8] sm:$0xff]
        %558 = vmatprep.subr.bf16.mxu0 0
        %559 = vmatpush1.bf16.msra.mxu0 0
        %560 = vmatprep.subr.bf16.mxu0 0
        %561 = vmatpush1.bf16.msra.mxu0 0
        %562 = vmatprep.subr.bf16.mxu0 0
        %563 = vmatpush1.bf16.msra.mxu0 0
        %564 = vmatprep.subr.bf16.mxu0 0
        %565 = vmatpush1.bf16.msra.mxu0 0
        %566 = vmatprep.subr.bf16.mxu0 0
        %567 = vmatpush1.bf16.msra.mxu0 0
        %568 = vmatprep.subr.bf16.mxu0 0
        %569 = vmatpush1.bf16.msra.mxu0 1065369472
        %570 = vmatprep.subr.bf16.mxu0 0
        %571 = vmatpush1.bf16.msra.mxu0 1065369472
        %572 = vmatprep.subr.bf16.mxu0 0
        %573 = vmatpush1.bf16.msra.mxu0 1065369472
        %574 = vmatprep.subr.bf16.mxu0 0
        %575 = vmatpush2.bf16.msra.mxu0 0
        %576 = vmatprep.subr.bf16.mxu0 0
        %577 = vmatpush2.bf16.msra.mxu0 0
        %578 = vmatprep.subr.bf16.mxu0 0
        %579 = vmatpush2.bf16.msra.mxu0 0
        %580 = vmatprep.subr.bf16.mxu0 0
        %581 = vmatpush2.bf16.msra.mxu0 0
        %582 = vmatprep.subr.bf16.mxu0 0
        %583 = vmatpush2.bf16.msra.mxu0 0
        %584 = vmatprep.subr.bf16.mxu0 0
        %585 = vmatpush2.bf16.msra.mxu0 0
        %586 = vmatprep.subr.bf16.mxu0 0
        %587 = vmatpush2.bf16.msra.mxu0 0
        %588 = vmatprep.subr.bf16.mxu0 0
        %589 = vmatpush2.bf16.msra.mxu0 0
        %590 = vmatprep.mubr.bf16.mxu0 0
        %591 = vmatmul.mubr.bf16.gmra.mxu0 %v509
        %v592 = vpop.f32.mrf.mxu0
        %v593 = vadd.f32 0.0, %v592
        %v594 = vpop.f32.mrf.mxu0
        %v595 = vpop.f32.mrf.mxu0
        %v596 = vadd.f32 0.0, %v595
        %v597 = vpop.f32.mrf.mxu0
        %598 = vdwg.mxu0
        %v599 = vadd.f32 %v556, %v593
        %v600 = vadd.f32 %v557, %v596
        %vm601 = vcmask 7168
        %602 = vst.msk [vmem:[#allocation3] sm:$0xff] %vm601, %v599
        %603 = vst.msk [vmem:[#allocation3 + $0x8] sm:$0xff] %vm601, %v600
        // Predicated region
        $region45: #{tpu_custom_call.1} parent=31 // pred_check
          %p604 = pneg %p277
        $region46: #{tpu_custom_call.1} parent=31 // pred_check_branch
          %606 = sbr.rel (%p604) target = $region48
        $region47: #{tpu_custom_call.1} parent=31 // pred_region
          %v607 = vld [vmem:[#allocation3] sm:$0xff]
          %v608 = vld [vmem:[#allocation3 + $0x8] sm:$0xff]
          %v609 = vadd.f32 %v607, 1e-14
          %v610 = vadd.f32 %v608, 1e-14
          %v611 = vrcp.pop %v609
          %v612 = vrcp.pop %v610
          %v613 = vld [vmem:[#allocation2] sm:$0xff]
          %v614 = vld [vmem:[#allocation2 + $0x8] sm:$0xff]
          %616 = vset.pattern.permute.xlu0 0
          %617 = vperm.xlu0 %616, %v611
          %v618 = vpop.permute.xlu0 %617
          %621 = vset.pattern.permute.xlu0 0
          %622 = vperm.xlu0 %621, %v612
          %v623 = vpop.permute.xlu0 %622
          %v625 = vmul.f32 %v613, %v618
          %v626 = vmul.f32 %v614, %v623
          %v627 = vpack.c.bf16 %v626, %v625
          %v628 = vld [vmem:[%s223] sm:$0xff]
          %v629 = vld [vmem:[%s223 + $0x8] sm:$0xff]
          %v630 = vpack.c.bf16 %v629, %v628
          %v632 = vsel %vm353, %v627, 0
          %634 = vmatprep.subr.bf16.mxu0 0
          %635 = vmatpush1.bf16.msra.mxu0 0
          %636 = vmatprep.subr.bf16.mxu0 0
          %637 = vmatpush1.bf16.msra.mxu0 0
          %638 = vmatprep.subr.bf16.mxu0 0
          %639 = vmatpush1.bf16.msra.mxu0 0
          %640 = vmatprep.subr.bf16.mxu0 0
          %641 = vmatpush1.bf16.msra.mxu0 0
          %642 = vmatprep.subr.bf16.mxu0 0
          %643 = vmatpush1.bf16.msra.mxu0 0
          %644 = vmatprep.subr.bf16.mxu0 0
          %645 = vmatpush1.bf16.msra.mxu0 0
          %646 = vmatprep.subr.bf16.mxu0 0
          %647 = vmatpush1.bf16.msra.mxu0 0
          %648 = vmatprep.subr.bf16.mxu0 0
          %649 = vmatpush1.bf16.msra.mxu0 %v630
          %650 = vmatprep.subr.bf16.mxu0 0
          %651 = vmatpush2.bf16.msra.mxu0 0
          %652 = vmatprep.subr.bf16.mxu0 0
          %653 = vmatpush2.bf16.msra.mxu0 0
          %654 = vmatprep.subr.bf16.mxu0 0
          %655 = vmatpush2.bf16.msra.mxu0 0
          %656 = vmatprep.subr.bf16.mxu0 0
          %657 = vmatpush2.bf16.msra.mxu0 0
          %658 = vmatprep.subr.bf16.mxu0 0
          %659 = vmatpush2.bf16.msra.mxu0 0
          %660 = vmatprep.subr.bf16.mxu0 0
          %661 = vmatpush2.bf16.msra.mxu0 0
          %662 = vmatprep.subr.bf16.mxu0 0
          %663 = vmatpush2.bf16.msra.mxu0 0
          %664 = vmatprep.subr.bf16.mxu0 0
          %665 = vmatpush2.bf16.msra.mxu0 0
          %666 = vmatprep.mubr.bf16.mxu0 0
          %667 = vmatmul.mubr.bf16.gmra.mxu0 %v632
          %v668 = vpop.f32.mrf.mxu0
          %v669 = vadd.f32 0.0, %v668
          %v670 = vpop.f32.mrf.mxu0
          %v671 = vpop.f32.mrf.mxu0
          %v672 = vadd.f32 0.0, %v671
          %v673 = vpop.f32.mrf.mxu0
          %674 = vdwg.mxu0
          %vm675 = vcmask 261120
          %676 = vst.msk [vmem:[%s266] sm:$0xff] %vm675, %v669
          %677 = vst.msk [vmem:[%s266 + $0x8] sm:$0xff] %vm675, %v672
        $region48: #{tpu_custom_call.1} parent=31 // pred_fallthru
          _
        %s678 = sand.u32 %s125, 1
        %s679 = scalar_lea.sflag [#allocation6], %s678
        %s680 = sand.u32 %s125, 1
        %s681 = smul.addr %s680, 16
        %s682 = scalar_lea.vmem [#allocation9], %s681
        // Predicated region
        $region49: #{tpu_custom_call.1} parent=31 // pred_check
          %p683 = pneg %p135
        $region50: #{tpu_custom_call.1} parent=31 // pred_check_branch
          %685 = sbr.rel (%p683) target = $region52
        $region51: #{tpu_custom_call.1} parent=31 // pred_region
          %s687 = ssub.s32 256, 256
          %688 = vsyncadd %s679, %s687
          %s689 = smul.addr %s27, 2
          %s690 = smul.addr %s689, 128
          %s691 = scalar_lea.hbm %s3, %s690
          %s692 = sshll.u32 %s682, 4
          %s693 = int_to_ptr.vmem [resolvable:$true] %s692
          %698 = dma.vmem_to_hbm [thread:$0]  %s693, 256, %s691, %s679, 128, 128, 8
        $region52: #{tpu_custom_call.1} parent=31 // pred_fallthru
          _
      $region32: #{tpu_custom_call.1} parent=5 // pred_fallthru
        _
      %p699 = scmp.le.s32.totalorder 2, %s18
      // Predicated region
      $region53: #{tpu_custom_call.1} parent=5 // pred_check
        %p700 = pneg %p699
      $region54: #{tpu_custom_call.1} parent=5 // pred_check_branch
        %702 = sbr.rel (%p700) target = $region56
      $region55: #{tpu_custom_call.1} parent=5 // pred_region
        %s703 = ssub.s32 %s18, 2
        // Predicated region
        $region57: #{tpu_custom_call.1} parent=55 // pred_check
          %p704 = pneg %p141
        $region58: #{tpu_custom_call.1} parent=55 // pred_check_branch
          %706 = sbr.rel (%p704) target = $region60
        $region59: #{tpu_custom_call.1} parent=55 // pred_region
          %s707 = sand.u32 %s126, 1
          %s708 = scalar_lea.sflag [#allocation6], %s707
          %s709 = sand.u32 %s126, 1
          %s710 = smul.addr %s709, 16
          %s711 = scalar_lea.vmem [#allocation9], %s710
          %712 = dma.done %s708, 256
        $region60: #{tpu_custom_call.1} parent=55 // pred_fallthru
          _
      $region56: #{tpu_custom_call.1} parent=5 // pred_fallthru
        _
    $region6: #{tpu_custom_call.1} parent=1 // loop_footer
      %s22 = sadd.s32 1, %s18
    $region7: #{tpu_custom_call.1} parent=1 // loop_footer_branch
      %17 = sbr.rel target = $region3
    $region8: #{tpu_custom_call.1} parent=1 // loop_exit
      _
    %713 = vsyncpa [#allocation5], 1
    %s714 = scalar_lea.sflag [#allocation5], 1
    %715 = vsyncpa %s714, 1
    %716 = vsyncpa [#allocation8], 1
    %s717 = scalar_lea.sflag [#allocation8], 1
    %718 = vsyncpa %s717, 1
    %719 = vsyncpa [#allocation6], 1
    %s720 = scalar_lea.sflag [#allocation6], 1
    %721 = vsyncpa %s720, 1

</llo_original>
